<compile_context>
chip_gen: v5e
topology: v5e:2x2
jax: 0.10.0
libtpu: 0.0.40
codegen_flags: <defaults>
</compile_context>

<pallas_src>
import jax
import jax.numpy as jnp
from jax import lax
from jax.experimental import pallas as pl
from jax.experimental.pallas import tpu as pltpu


def _subnet_kernel(x_ref,
                   w1_ref, b1_ref,
                   w2_ref, b2_ref,
                   w3_ref, b3_ref,
                   o_ref):
    # One batch tile of the whole (tiny) MLP; weights/biases are VMEM-resident.
    x = x_ref[...]

    # fc1: masked linear (mask pre-folded) + ReLU
    h1 = jnp.dot(x, w1_ref[...], preferred_element_type=jnp.float32,
                 precision=lax.Precision.HIGHEST) + b1_ref[...]
    h1 = jnp.maximum(h1, 0.0)

    # fc2: masked linear + ReLU
    h2 = jnp.dot(h1, w2_ref[...], preferred_element_type=jnp.float32,
                 precision=lax.Precision.HIGHEST) + b2_ref[...]
    h2 = jnp.maximum(h2, 0.0)

    # out: masked linear (no activation); narrow (tile_b, 3) store — the few
    # masked-lane store bytes are negligible vs. the saved HBM writeback.
    o_ref[...] = jnp.dot(h2, w3_ref[...], preferred_element_type=jnp.float32,
                         precision=lax.Precision.HIGHEST) + b3_ref[...]


def _pick_tile_b(B):
    """Generation-aware batch tile: big enough to amortize the ~0.35us/step
    overhead, small enough for VMEM (x/out double-buffers + h1/h2 intermediates
    are all lane-padded to 128 -> ~3-3.5 KB per row), and >=2 tiles when the
    batch allows so v7x can use both TensorCores."""
    b8 = max(8, pl.cdiv(B, 8) * 8)
    try:
        kind = jax.devices()[0].device_kind.lower()
    except Exception:  # pragma: no cover - defensive
        kind = ""
    cap = 2048 if "v7" in kind else 4096   # v7x: 64 MiB VMEM (32 MiB scoped)
    if b8 >= 16:
        # at least 2 grid tiles (megacore on v7x); rounded up to 8 sublanes
        tile = min(cap, pl.cdiv(b8 // 2, 8) * 8)
    else:
        tile = min(cap, b8)
    return max(8, (tile // 8) * 8)


def subnet_forward(x, params, masks, *, tile_b=None):
    """x: (B, 4) float32. params/masks: dicts of PyTorch-layout tensors.

    Returns (B, out_features) float32 logits, matching Subnet.forward with a
    'softnet' mask applied to each layer's weights.
    """
    B, in_f = x.shape
    out_f = params["out.weight"].shape[0]

    # Fold mask into weight, transpose (out, in) -> (in, out), make bias (1, out).
    def prep(name):
        w = (params[name + ".weight"] * masks[name + ".weight"]).astype(jnp.float32)
        w = jnp.transpose(w)                                   # (in, out)
        b = params[name + ".bias"].astype(jnp.float32).reshape(1, -1)
        return w, b

    w1, b1 = prep("fc1")
    w2, b2 = prep("fc2")
    w3, b3 = prep("out")

    if tile_b is None:
        tile_b = _pick_tile_b(B)
    tile_b = max(8, (tile_b // 8) * 8)

    n_tiles = pl.cdiv(B, tile_b)
    b_pad = n_tiles * tile_b
    xp = x.astype(jnp.float32)
    if b_pad != B:
        xp = jnp.pad(xp, ((0, b_pad - B), (0, 0)))

    # Advisory cost hint: deeply memory-bound (~3.5 FLOP/byte).
    flops = 2 * b_pad * (in_f * w1.shape[1] + w2.shape[0] * w2.shape[1]
                         + w3.shape[0] * out_f)
    bytes_accessed = b_pad * 4 * (in_f + out_f) + 4 * (
        w1.size + b1.size + w2.size + b2.size + w3.size + b3.size)
    cost = pl.CostEstimate(flops=flops, transcendentals=0,
                           bytes_accessed=bytes_accessed)

    resident = lambda i: (0, 0)  # weights/biases stay put across batch tiles
    out = pl.pallas_call(
        _subnet_kernel,
        out_shape=jax.ShapeDtypeStruct((b_pad, out_f), jnp.float32),
        grid=(n_tiles,),
        in_specs=[
            pl.BlockSpec((tile_b, in_f), lambda i: (i, 0)),
            pl.BlockSpec(w1.shape, resident),
            pl.BlockSpec(b1.shape, resident),
            pl.BlockSpec(w2.shape, resident),
            pl.BlockSpec(b2.shape, resident),
            pl.BlockSpec(w3.shape, resident),
            pl.BlockSpec(b3.shape, resident),
        ],
        out_specs=pl.BlockSpec((tile_b, out_f), lambda i: (i, 0)),
        compiler_params=pltpu.CompilerParams(
            dimension_semantics=("parallel",)),
        cost_estimate=cost,
    )(xp, w1, b1, w2, b2, w3, b3)

    if b_pad != B:
        out = out[:B]
    return out


def _reference_forward(x, params, masks):
    def lin(name, h):
        w = params[name + ".weight"] * masks[name + ".weight"]
        return h @ w.T + params[name + ".bias"]
    h = jax.nn.relu(lin("fc1", x))
    h = jax.nn.relu(lin("fc2", h))
    return lin("out", h)


if __name__ == "__main__":
    # Subnet(input_features=4, hidden_layer1=25, hidden_layer2=30, output_features=3)
    IN, H1, H2, OUT = 4, 25, 30, 3
    B = 40          # exercises multiple grid steps + a padded last tile

    key = jax.random.PRNGKey(0)
    ks = jax.random.split(key, 10)

    params = {
        "fc1.weight": jax.random.normal(ks[0], (H1, IN), jnp.float32) * 0.5,
        "fc1.bias":   jax.random.normal(ks[1], (H1,), jnp.float32) * 0.1,
        "fc2.weight": jax.random.normal(ks[2], (H2, H1), jnp.float32) * 0.3,
        "fc2.bias":   jax.random.normal(ks[3], (H2,), jnp.float32) * 0.1,
        "out.weight": jax.random.normal(ks[4], (OUT, H2), jnp.float32) * 0.3,
        "out.bias":   jax.random.normal(ks[5], (OUT,), jnp.float32) * 0.1,
    }
    # 'softnet' masks: soft (0,1) values, as produced by get_mask() on a softnet model.
    masks = {
        "fc1.weight": jax.nn.sigmoid(jax.random.normal(ks[6], (H1, IN), jnp.float32)),
        "fc2.weight": jax.nn.sigmoid(jax.random.normal(ks[7], (H2, H1), jnp.float32)),
        "out.weight": jax.nn.sigmoid(jax.random.normal(ks[8], (OUT, H2), jnp.float32)),
    }

    x = jax.random.normal(ks[9], (B, IN), jnp.float32)

    y_ref = _reference_forward(x, params, masks)

    # Auto-picked tile (>=2 tiles, generation-aware cap).
    y = jax.block_until_ready(subnet_forward(x, params, masks))
    assert y.shape == (B, OUT)
    assert jnp.allclose(y, y_ref, atol=1e-5, rtol=1e-5), "Pallas kernel mismatch (auto tile)"

    # Explicit small tile: multiple grid steps + padded last tile.
    y2 = jax.block_until_ready(subnet_forward(x, params, masks, tile_b=16))
    assert jnp.allclose(y2, y_ref, atol=1e-5, rtol=1e-5), "Pallas kernel mismatch (tile_b=16)"

    # preds = argmax over logits, matching test()'s per-sample argmax.
    _ = jnp.argmax(y, axis=-1)

    print("KERNEL_OK")
</pallas_src>

<mosaic_0001>
module attributes {stable_mosaic.version = 11 : i64} {
  func.func @_subnet_kernel(%arg0: i32, %arg1: memref<24x4xf32, #tpu.memory_space<vmem>>, %arg2: memref<4x25xf32, #tpu.memory_space<vmem>>, %arg3: memref<1x25xf32, #tpu.memory_space<vmem>>, %arg4: memref<25x30xf32, #tpu.memory_space<vmem>>, %arg5: memref<1x30xf32, #tpu.memory_space<vmem>>, %arg6: memref<30x3xf32, #tpu.memory_space<vmem>>, %arg7: memref<1x3xf32, #tpu.memory_space<vmem>>, %arg8: memref<24x3xf32, #tpu.memory_space<vmem>>) attributes {dimension_semantics = [#tpu.dimension_semantics<parallel>], iteration_bounds = array<i64: 2>, scalar_prefetch = 0 : i64, scratch_operands = 0 : i64, tpu.core_type = #tpu.core_type<tc>, window_params = [{transform_indices = @transform_0, window_bounds = array<i64: 24, 4>}, {pipeline_mode = #tpu.pipeline_mode<synchronous>, transform_indices = @transform_1, window_bounds = array<i64: 4, 25>}, {pipeline_mode = #tpu.pipeline_mode<synchronous>, transform_indices = @transform_2, window_bounds = array<i64: 1, 25>}, {pipeline_mode = #tpu.pipeline_mode<synchronous>, transform_indices = @transform_3, window_bounds = array<i64: 25, 30>}, {pipeline_mode = #tpu.pipeline_mode<synchronous>, transform_indices = @transform_4, window_bounds = array<i64: 1, 30>}, {pipeline_mode = #tpu.pipeline_mode<synchronous>, transform_indices = @transform_5, window_bounds = array<i64: 30, 3>}, {pipeline_mode = #tpu.pipeline_mode<synchronous>, transform_indices = @transform_6, window_bounds = array<i64: 1, 3>}, {transform_indices = @transform_7, window_bounds = array<i64: 24, 3>}]} {
    %c0 = arith.constant 0 : index
    %c0_0 = arith.constant 0 : index
    %0 = vector.load %arg1[%c0, %c0_0] : memref<24x4xf32, #tpu.memory_space<vmem>>, vector<24x4xf32>
    %c0_1 = arith.constant 0 : index
    %c0_2 = arith.constant 0 : index
    %1 = vector.load %arg2[%c0_1, %c0_2] : memref<4x25xf32, #tpu.memory_space<vmem>>, vector<4x25xf32>
    %cst = arith.constant dense<0.000000e+00> : vector<24x25xf32>
    %2 = tpu.matmul %0, %1, %cst {dimension_numbers = #tpu.dot_dimension_numbers<[1], [0], [0], [1], [0, 0, 1, 1], [], []>, precision = #tpu.contract_precision<fp32>} : vector<24x4xf32>, vector<4x25xf32>, vector<24x25xf32> -> vector<24x25xf32>
    %c0_3 = arith.constant 0 : index
    %c0_4 = arith.constant 0 : index
    %3 = vector.load %arg3[%c0_3, %c0_4] : memref<1x25xf32, #tpu.memory_space<vmem>>, vector<1x25xf32>
    %4 = vector.broadcast %3 : vector<1x25xf32> to vector<24x25xf32>
    %5 = arith.addf %2, %4 : vector<24x25xf32>
    %cst_5 = arith.constant 0.000000e+00 : f32
    %6 = vector.broadcast %cst_5 : f32 to vector<24x25xf32>
    %7 = arith.maximumf %5, %6 : vector<24x25xf32>
    %c0_6 = arith.constant 0 : index
    %c0_7 = arith.constant 0 : index
    %8 = vector.load %arg4[%c0_6, %c0_7] : memref<25x30xf32, #tpu.memory_space<vmem>>, vector<25x30xf32>
    %cst_8 = arith.constant dense<0.000000e+00> : vector<24x30xf32>
    %9 = tpu.matmul %7, %8, %cst_8 {dimension_numbers = #tpu.dot_dimension_numbers<[1], [0], [0], [1], [0, 0, 1, 1], [], []>, precision = #tpu.contract_precision<fp32>} : vector<24x25xf32>, vector<25x30xf32>, vector<24x30xf32> -> vector<24x30xf32>
    %c0_9 = arith.constant 0 : index
    %c0_10 = arith.constant 0 : index
    %10 = vector.load %arg5[%c0_9, %c0_10] : memref<1x30xf32, #tpu.memory_space<vmem>>, vector<1x30xf32>
    %11 = vector.broadcast %10 : vector<1x30xf32> to vector<24x30xf32>
    %12 = arith.addf %9, %11 : vector<24x30xf32>
    %cst_11 = arith.constant 0.000000e+00 : f32
    %13 = vector.broadcast %cst_11 : f32 to vector<24x30xf32>
    %14 = arith.maximumf %12, %13 : vector<24x30xf32>
    %c0_12 = arith.constant 0 : index
    %c0_13 = arith.constant 0 : index
    %15 = vector.load %arg6[%c0_12, %c0_13] : memref<30x3xf32, #tpu.memory_space<vmem>>, vector<30x3xf32>
    %cst_14 = arith.constant dense<0.000000e+00> : vector<24x3xf32>
    %16 = tpu.matmul %14, %15, %cst_14 {dimension_numbers = #tpu.dot_dimension_numbers<[1], [0], [0], [1], [0, 0, 1, 1], [], []>, precision = #tpu.contract_precision<fp32>} : vector<24x30xf32>, vector<30x3xf32>, vector<24x3xf32> -> vector<24x3xf32>
    %c0_15 = arith.constant 0 : index
    %c0_16 = arith.constant 0 : index
    %17 = vector.load %arg7[%c0_15, %c0_16] : memref<1x3xf32, #tpu.memory_space<vmem>>, vector<1x3xf32>
    %18 = vector.broadcast %17 : vector<1x3xf32> to vector<24x3xf32>
    %19 = arith.addf %16, %18 : vector<24x3xf32>
    %c0_17 = arith.constant 0 : index
    %c0_18 = arith.constant 0 : index
    %20 = vector.load %arg8[%c0_17, %c0_18] : memref<24x3xf32, #tpu.memory_space<vmem>>, vector<24x3xf32>
    tpu.vector_store %arg8[%c0_17, %c0_18], %19 {strides = array<i32>} : memref<24x3xf32, #tpu.memory_space<vmem>>, vector<24x3xf32>,
    return
  }
  func.func @transform_0(%arg0: i32) -> (i32, i32) {
    %c0_i32 = arith.constant 0 : i32
    %c0_i32_0 = arith.constant 0 : i32
    return %arg0, %c0_i32 : i32, i32
  }
  func.func @transform_1(%arg0: i32) -> (i32, i32) {
    %c0_i32 = arith.constant 0 : i32
    %c0_i32_0 = arith.constant 0 : i32
    %c0_i32_1 = arith.constant 0 : i32
    return %c0_i32, %c0_i32_0 : i32, i32
  }
  func.func @transform_2(%arg0: i32) -> (i32, i32) {
    %c0_i32 = arith.constant 0 : i32
    %c0_i32_0 = arith.constant 0 : i32
    %c0_i32_1 = arith.constant 0 : i32
    return %c0_i32, %c0_i32_0 : i32, i32
  }
  func.func @transform_3(%arg0: i32) -> (i32, i32) {
    %c0_i32 = arith.constant 0 : i32
    %c0_i32_0 = arith.constant 0 : i32
    %c0_i32_1 = arith.constant 0 : i32
    return %c0_i32, %c0_i32_0 : i32, i32
  }
  func.func @transform_4(%arg0: i32) -> (i32, i32) {
    %c0_i32 = arith.constant 0 : i32
    %c0_i32_0 = arith.constant 0 : i32
    %c0_i32_1 = arith.constant 0 : i32
    return %c0_i32, %c0_i32_0 : i32, i32
  }
  func.func @transform_5(%arg0: i32) -> (i32, i32) {
    %c0_i32 = arith.constant 0 : i32
    %c0_i32_0 = arith.constant 0 : i32
    %c0_i32_1 = arith.constant 0 : i32
    return %c0_i32, %c0_i32_0 : i32, i32
  }
  func.func @transform_6(%arg0: i32) -> (i32, i32) {
    %c0_i32 = arith.constant 0 : i32
    %c0_i32_0 = arith.constant 0 : i32
    %c0_i32_1 = arith.constant 0 : i32
    return %c0_i32, %c0_i32_0 : i32, i32
  }
  func.func @transform_7(%arg0: i32) -> (i32, i32) {
    %c0_i32 = arith.constant 0 : i32
    %c0_i32_0 = arith.constant 0 : i32
    return %arg0, %c0_i32 : i32, i32
  }
}

</mosaic_0001>

<llo_original>
// kernel: tpu_custom_call.1
$region0: #{tpu_custom_call.1}
  #allocation0 [shape = 'u32[]', space=smem, size = 0x4, offset = 0x4, fixed_abs, tag = 'smem constant byte address 0x4 - core index']
  #allocation1 [shape = 'u32[72,128]{1,0:T(1,128)}', space=vmem, size = 0x9000, scoped, tag = 'internal scratch']
  %s0 = inlined_call_operand.vmem [shape: f32[48,4], index: 0, kind: input, shape index: {}]
  %s1 = inlined_call_operand.vmem [shape: f32[4,25], index: 1, kind: input, shape index: {}]
  %s2 = inlined_call_operand.vmem [shape: f32[1,25], index: 2, kind: input, shape index: {}]
  %s3 = inlined_call_operand.vmem [shape: f32[25,30], index: 3, kind: input, shape index: {}]
  %s4 = inlined_call_operand.vmem [shape: f32[1,30], index: 4, kind: input, shape index: {}]
  %s5 = inlined_call_operand.vmem [shape: f32[30,3], index: 5, kind: input, shape index: {}]
  %s6 = inlined_call_operand.vmem [shape: f32[1,3], index: 6, kind: input, shape index: {}]
  %s7 = inlined_call_operand.vmem [shape: f32[48,3], index: 7, kind: output, shape index: {}]
  %s8 = sld [smem:[#allocation0]]
  $region61: #{tpu_custom_call.1} parent=0
    _
  %s10 = ssub.s32 1, %s8
  %s11 = scalar_select 0, %s10, %s8
  loop: start=0, step=1, limit=4
  $region2: #{tpu_custom_call.1} parent=0 // loop_pre_header
    _
  $region3: #{tpu_custom_call.1} parent=0 // loop_header
    %s13 = sphi 0, %s17
    %p14 = scmp.ge.s32.totalorder %s13, 4
    %s23 = sphi 0, %s25
    %s26 = sphi 0, %s23
    %s27 = sphi 0, %s26
    %s43 = sphi 0, %s27
    %s47 = sphi 0, %s47
    %s49 = sphi 0, %s47
    %s50 = sphi 0, %s49
    %s64 = sphi 0, %s50
    %s68 = sphi 0, %s68
    %s70 = sphi 0, %s68
    %s71 = sphi 0, %s70
    %s85 = sphi 0, %s71
    %s89 = sphi 0, %s89
    %s91 = sphi 0, %s89
    %s92 = sphi 0, %s91
    %s106 = sphi 0, %s92
    %s110 = sphi 0, %s110
    %s112 = sphi 0, %s110
    %s113 = sphi 0, %s112
    %s127 = sphi 0, %s113
    %s131 = sphi 0, %s131
    %s133 = sphi 0, %s131
    %s134 = sphi 0, %s133
    %s148 = sphi 0, %s134
    %s152 = sphi 0, %s152
    %s154 = sphi 0, %s152
    %s155 = sphi 0, %s154
    %s169 = sphi 0, %s155
    %s175 = sphi 0, %s177
    %s178 = sphi 0, %s175
    %s179 = sphi 0, %s178
    %s195 = sphi 0, %s179
  $region4: #{tpu_custom_call.1} parent=0 // loop_header_branch
    %16 = sbr.rel (%p14) target = $region8
  $region5: #{tpu_custom_call.1} parent=0 // loop_body
    %s18 = ssub.s32 %s13, 1
    %s19 = ssub.s32 %s13, 2
    %s20 = sadd.s32 %s13, 1
    %s21 = ssub.s32 %s13, %s20
    %p22 = scmp.eq.s32.totalorder %s21, 0
    %s24 = sadd.s32 %s23, 1
    %s25 = scalar_select %p22, %s23, %s24
    %p28 = pneg %p22
    %p29 = scmp.eq.s32.totalorder %s13, 1
    %p30 = por %p28, %p29
    %p31 = scmp.ne.s32.totalorder %s23, %s26
    %p32 = scmp.eq.s32.totalorder %s13, 0
    %p33 = por %p31, %p32
    %p34 = scmp.ne.s32.totalorder %s23, %s26
    %p35 = scmp.eq.s32.totalorder %s18, 1
    %p36 = por %p34, %p35
    %p37 = scmp.ne.s32.totalorder %s26, %s27
    %p38 = scmp.eq.s32.totalorder %s18, 0
    %p39 = por %p37, %p38
    %p40 = scmp.ne.s32.totalorder %s26, %s27
    %p41 = scmp.eq.s32.totalorder %s19, 1
    %p42 = por %p40, %p41
    %p44 = scmp.ne.s32.totalorder %s27, %s43
    %p45 = scmp.eq.s32.totalorder %s19, 0
    %p46 = por %p44, %p45
    %s48 = sadd.s32 %s47, 1
    %p51 = scmp.eq.s32.totalorder %s13, 1
    %p52 = scmp.ne.s32.totalorder %s47, %s49
    %p53 = scmp.eq.s32.totalorder %s13, 0
    %p54 = por %p52, %p53
    %p55 = scmp.ne.s32.totalorder %s47, %s49
    %p56 = scmp.eq.s32.totalorder %s18, 1
    %p57 = por %p55, %p56
    %p58 = scmp.ne.s32.totalorder %s49, %s50
    %p59 = scmp.eq.s32.totalorder %s18, 0
    %p60 = por %p58, %p59
    %p61 = scmp.ne.s32.totalorder %s49, %s50
    %p62 = scmp.eq.s32.totalorder %s19, 1
    %p63 = por %p61, %p62
    %p65 = scmp.ne.s32.totalorder %s50, %s64
    %p66 = scmp.eq.s32.totalorder %s19, 0
    %p67 = por %p65, %p66
    %s69 = sadd.s32 %s68, 1
    %p72 = scmp.eq.s32.totalorder %s13, 1
    %p73 = scmp.ne.s32.totalorder %s68, %s70
    %p74 = scmp.eq.s32.totalorder %s13, 0
    %p75 = por %p73, %p74
    %p76 = scmp.ne.s32.totalorder %s68, %s70
    %p77 = scmp.eq.s32.totalorder %s18, 1
    %p78 = por %p76, %p77
    %p79 = scmp.ne.s32.totalorder %s70, %s71
    %p80 = scmp.eq.s32.totalorder %s18, 0
    %p81 = por %p79, %p80
    %p82 = scmp.ne.s32.totalorder %s70, %s71
    %p83 = scmp.eq.s32.totalorder %s19, 1
    %p84 = por %p82, %p83
    %p86 = scmp.ne.s32.totalorder %s71, %s85
    %p87 = scmp.eq.s32.totalorder %s19, 0
    %p88 = por %p86, %p87
    %s90 = sadd.s32 %s89, 1
    %p93 = scmp.eq.s32.totalorder %s13, 1
    %p94 = scmp.ne.s32.totalorder %s89, %s91
    %p95 = scmp.eq.s32.totalorder %s13, 0
    %p96 = por %p94, %p95
    %p97 = scmp.ne.s32.totalorder %s89, %s91
    %p98 = scmp.eq.s32.totalorder %s18, 1
    %p99 = por %p97, %p98
    %p100 = scmp.ne.s32.totalorder %s91, %s92
    %p101 = scmp.eq.s32.totalorder %s18, 0
    %p102 = por %p100, %p101
    %p103 = scmp.ne.s32.totalorder %s91, %s92
    %p104 = scmp.eq.s32.totalorder %s19, 1
    %p105 = por %p103, %p104
    %p107 = scmp.ne.s32.totalorder %s92, %s106
    %p108 = scmp.eq.s32.totalorder %s19, 0
    %p109 = por %p107, %p108
    %s111 = sadd.s32 %s110, 1
    %p114 = scmp.eq.s32.totalorder %s13, 1
    %p115 = scmp.ne.s32.totalorder %s110, %s112
    %p116 = scmp.eq.s32.totalorder %s13, 0
    %p117 = por %p115, %p116
    %p118 = scmp.ne.s32.totalorder %s110, %s112
    %p119 = scmp.eq.s32.totalorder %s18, 1
    %p120 = por %p118, %p119
    %p121 = scmp.ne.s32.totalorder %s112, %s113
    %p122 = scmp.eq.s32.totalorder %s18, 0
    %p123 = por %p121, %p122
    %p124 = scmp.ne.s32.totalorder %s112, %s113
    %p125 = scmp.eq.s32.totalorder %s19, 1
    %p126 = por %p124, %p125
    %p128 = scmp.ne.s32.totalorder %s113, %s127
    %p129 = scmp.eq.s32.totalorder %s19, 0
    %p130 = por %p128, %p129
    %s132 = sadd.s32 %s131, 1
    %p135 = scmp.eq.s32.totalorder %s13, 1
    %p136 = scmp.ne.s32.totalorder %s131, %s133
    %p137 = scmp.eq.s32.totalorder %s13, 0
    %p138 = por %p136, %p137
    %p139 = scmp.ne.s32.totalorder %s131, %s133
    %p140 = scmp.eq.s32.totalorder %s18, 1
    %p141 = por %p139, %p140
    %p142 = scmp.ne.s32.totalorder %s133, %s134
    %p143 = scmp.eq.s32.totalorder %s18, 0
    %p144 = por %p142, %p143
    %p145 = scmp.ne.s32.totalorder %s133, %s134
    %p146 = scmp.eq.s32.totalorder %s19, 1
    %p147 = por %p145, %p146
    %p149 = scmp.ne.s32.totalorder %s134, %s148
    %p150 = scmp.eq.s32.totalorder %s19, 0
    %p151 = por %p149, %p150
    %s153 = sadd.s32 %s152, 1
    %p156 = scmp.eq.s32.totalorder %s13, 1
    %p157 = scmp.ne.s32.totalorder %s152, %s154
    %p158 = scmp.eq.s32.totalorder %s13, 0
    %p159 = por %p157, %p158
    %p160 = scmp.ne.s32.totalorder %s152, %s154
    %p161 = scmp.eq.s32.totalorder %s18, 1
    %p162 = por %p160, %p161
    %p163 = scmp.ne.s32.totalorder %s154, %s155
    %p164 = scmp.eq.s32.totalorder %s18, 0
    %p165 = por %p163, %p164
    %p166 = scmp.ne.s32.totalorder %s154, %s155
    %p167 = scmp.eq.s32.totalorder %s19, 1
    %p168 = por %p166, %p167
    %p170 = scmp.ne.s32.totalorder %s155, %s169
    %p171 = scmp.eq.s32.totalorder %s19, 0
    %p172 = por %p170, %p171
    %s173 = ssub.s32 %s13, %s20
    %p174 = scmp.eq.s32.totalorder %s173, 0
    %s176 = sadd.s32 %s175, 1
    %s177 = scalar_select %p174, %s175, %s176
    %p180 = pneg %p174
    %p181 = scmp.eq.s32.totalorder %s13, 1
    %p182 = por %p180, %p181
    %p183 = scmp.ne.s32.totalorder %s175, %s178
    %p184 = scmp.eq.s32.totalorder %s13, 0
    %p185 = por %p183, %p184
    %p186 = scmp.ne.s32.totalorder %s175, %s178
    %p187 = scmp.eq.s32.totalorder %s18, 1
    %p188 = por %p186, %p187
    %p189 = scmp.ne.s32.totalorder %s178, %s179
    %p190 = scmp.eq.s32.totalorder %s18, 0
    %p191 = por %p189, %p190
    %p192 = scmp.ne.s32.totalorder %s178, %s179
    %p193 = scmp.eq.s32.totalorder %s19, 1
    %p194 = por %p192, %p193
    %p196 = scmp.ne.s32.totalorder %s179, %s195
    %p197 = scmp.eq.s32.totalorder %s19, 0
    %p198 = por %p196, %p197
    %p199 = scmp.le.s32.totalorder 1, %s13
    %p200 = scmp.lt.s32.totalorder %s13, 3
    %p201 = pnand %p199, %p200
    %p202 = pneg %p201
    // Predicated region
    $region9: #{tpu_custom_call.1} parent=5 // pred_check
      _
    $region10: #{tpu_custom_call.1} parent=5 // pred_check_branch
      %204 = sbr.rel (%p201) target = $region12
    $region11: #{tpu_custom_call.1} parent=5 // pred_region
      %s205 = ssub.s32 %s13, 1
      // Predicated region
      $region13: #{tpu_custom_call.1} parent=11 // pred_check
        %p206 = pneg %p60
      $region14: #{tpu_custom_call.1} parent=11 // pred_check_branch
        %208 = sbr.rel (%p206) target = $region16
      $region15: #{tpu_custom_call.1} parent=11 // pred_region
        _
      $region16: #{tpu_custom_call.1} parent=11 // pred_fallthru
        _
      // Predicated region
      $region17: #{tpu_custom_call.1} parent=11 // pred_check
        %p209 = pneg %p81
      $region18: #{tpu_custom_call.1} parent=11 // pred_check_branch
        %211 = sbr.rel (%p209) target = $region20
      $region19: #{tpu_custom_call.1} parent=11 // pred_region
        _
      $region20: #{tpu_custom_call.1} parent=11 // pred_fallthru
        _
      // Predicated region
      $region21: #{tpu_custom_call.1} parent=11 // pred_check
        %p212 = pneg %p102
      $region22: #{tpu_custom_call.1} parent=11 // pred_check_branch
        %214 = sbr.rel (%p212) target = $region24
      $region23: #{tpu_custom_call.1} parent=11 // pred_region
        _
      $region24: #{tpu_custom_call.1} parent=11 // pred_fallthru
        _
      // Predicated region
      $region25: #{tpu_custom_call.1} parent=11 // pred_check
        %p215 = pneg %p123
      $region26: #{tpu_custom_call.1} parent=11 // pred_check_branch
        %217 = sbr.rel (%p215) target = $region28
      $region27: #{tpu_custom_call.1} parent=11 // pred_region
        _
      $region28: #{tpu_custom_call.1} parent=11 // pred_fallthru
        _
      // Predicated region
      $region29: #{tpu_custom_call.1} parent=11 // pred_check
        %p218 = pneg %p144
      $region30: #{tpu_custom_call.1} parent=11 // pred_check_branch
        %220 = sbr.rel (%p218) target = $region32
      $region31: #{tpu_custom_call.1} parent=11 // pred_region
        _
      $region32: #{tpu_custom_call.1} parent=11 // pred_fallthru
        _
      // Predicated region
      $region33: #{tpu_custom_call.1} parent=11 // pred_check
        %p221 = pneg %p165
      $region34: #{tpu_custom_call.1} parent=11 // pred_check_branch
        %223 = sbr.rel (%p221) target = $region36
      $region35: #{tpu_custom_call.1} parent=11 // pred_region
        _
      $region36: #{tpu_custom_call.1} parent=11 // pred_fallthru
        _
    $region12: #{tpu_custom_call.1} parent=5 // pred_fallthru
      _
    %p224 = scmp.lt.s32.totalorder %s13, 2
    // Predicated region
    $region37: #{tpu_custom_call.1} parent=5 // pred_check
      %p225 = pneg %p224
    $region38: #{tpu_custom_call.1} parent=5 // pred_check_branch
      %227 = sbr.rel (%p225) target = $region40
    $region39: #{tpu_custom_call.1} parent=5 // pred_region
      // Predicated region
      $region41: #{tpu_custom_call.1} parent=39 // pred_check
        %p228 = pneg %p33
      $region42: #{tpu_custom_call.1} parent=39 // pred_check_branch
        %230 = sbr.rel (%p228) target = $region44
      $region43: #{tpu_custom_call.1} parent=39 // pred_region
        %s231 = smul.u32 3, %s13
        %p232 = scmp.lt.s32.totalorder %s231, 5
        %s233 = scalar_select %p232, %s231, 5
        %s234 = smul.addr %s233, 8
        %s235 = scalar_lea.vmem %s0, %s234
        %s236 = smul.u32 3, %s13
      $region44: #{tpu_custom_call.1} parent=39 // pred_fallthru
        _
    $region40: #{tpu_custom_call.1} parent=5 // pred_fallthru
      _
    %p237 = scmp.le.s32.totalorder 1, %s13
    %p238 = scmp.lt.s32.totalorder %s13, 3
    %p239 = pnand %p237, %p238
    %p240 = pneg %p239
    // Predicated region
    $region45: #{tpu_custom_call.1} parent=5 // pred_check
      _
    $region46: #{tpu_custom_call.1} parent=5 // pred_check_branch
      %242 = sbr.rel (%p239) target = $region48
    $region47: #{tpu_custom_call.1} parent=5 // pred_region
      %s243 = ssub.s32 %s13, 1
      %s244 = smul.u32 3, %s18
      %p245 = scmp.lt.s32.totalorder %s244, 5
      %s246 = scalar_select %p245, %s244, 5
      %s247 = smul.addr %s246, 8
      %s248 = scalar_lea.vmem %s0, %s247
      %p249 = pneg %p39
      %p250 = pneg %p36
      %p251 = pneg %p60
      %p252 = pneg %p57
      %p253 = pneg %p81
      %p254 = pneg %p78
      %p255 = pneg %p102
      %p256 = pneg %p99
      %p257 = pneg %p123
      %p258 = pneg %p120
      %p259 = pneg %p144
      %p260 = pneg %p141
      %p261 = pneg %p165
      %p262 = pneg %p162
      %p263 = pneg %p191
      %p264 = pneg %p188
      %s265 = smul.u32 3, %s18
      %p266 = scmp.lt.s32.totalorder %s265, 5
      %s267 = scalar_select %p266, %s265, 5
      %s268 = smul.addr %s267, 8
      %s269 = scalar_lea.vmem %s7, %s268
      %s270 = smul.u32 3, %s18
      %p271 = scmp.lt.s32.totalorder %s270, 5
      %s272 = scalar_select %p271, %s270, 5
      %s273 = smul.addr %s272, 8
      %s274 = scalar_lea.vmem %s0, %s273
      %s275 = smul.u32 3, %s18
      %s276 = smul.u32 3, %s18
      %p277 = scmp.lt.s32.totalorder %s276, 5
      %s278 = scalar_select %p277, %s276, 5
      %s279 = smul.addr %s278, 8
      %s280 = scalar_lea.vmem %s7, %s279
      %s281 = smul.u32 3, %s18
      %v282 = vld [vmem:[%s274] sm:$0xff]
      %v283 = vld [vmem:[%s274 + $0x8] sm:$0xff]
      %v284 = vld [vmem:[%s274 + $0x10] sm:$0xff]
      %v285 = vld [vmem:[%s1] sm:$0xf]
      %v286 = vld [vmem:[%s2] sm:$0x1]
      %v288 = vperm.slane %v286, 0
      %vm290 = vcmask 31744
      %v292 = vsel %vm290, %v282, 0
      %v295 = vsel %vm290, %v283, 0
      %v298 = vsel %vm290, %v284, 0
      %vm300 = vcmask 1043456
      %v302 = vsel %vm300, %v285, 0
      %304 = vmatpush.msra.mxu0 0.0
      %305 = vmatpush.msra.mxu0 0.0
      %306 = vmatpush.msra.mxu0 0.0
      %307 = vmatpush.msra.mxu0 0.0
      %308 = vmatpush.msra.mxu0 0.0
      %309 = vmatpush.msra.mxu0 0.0
      %310 = vmatpush.msra.mxu0 0.0
      %311 = vmatpush.msra.mxu0 0.0
      %312 = vmatpush.msra.mxu0 0.0
      %313 = vmatpush.msra.mxu0 0.0
      %314 = vmatpush.msra.mxu0 0.0
      %315 = vmatpush.msra.mxu0 0.0
      %316 = vmatpush.msra.mxu0 0.0
      %317 = vmatpush.msra.mxu0 0.0
      %318 = vmatpush.msra.mxu0 0.0
      %v319 = vand.u32 %v302, 4294901760
      %320 = vmatpush.msra.mxu0 %v319
      %v321 = vand.u32 %v292, 4294901760
      %v322 = vsub.f32 %v292, %v321
      %v323 = vand.u32 %v322, 4294901760
      %v324 = vsub.f32 %v322, %v323
      %v325 = vand.u32 %v324, 4294901760
      %326 = vmatmul.f32.gmra.mxu0 %v325
      %v327 = vpop.f32.mrf.mxu0
      %v328 = vadd.f32 %v288, %v327
      %v329 = vand.u32 %v295, 4294901760
      %v330 = vsub.f32 %v295, %v329
      %v331 = vand.u32 %v330, 4294901760
      %v332 = vsub.f32 %v330, %v331
      %v333 = vand.u32 %v332, 4294901760
      %334 = vmatmul.f32.gmra.mxu0 %v333
      %v335 = vpop.f32.mrf.mxu0
      %v336 = vadd.f32 %v288, %v335
      %v337 = vand.u32 %v298, 4294901760
      %v338 = vsub.f32 %v298, %v337
      %v339 = vand.u32 %v338, 4294901760
      %v340 = vsub.f32 %v338, %v339
      %v341 = vand.u32 %v340, 4294901760
      %342 = vmatmul.f32.gmra.mxu0 %v341
      %v343 = vpop.f32.mrf.mxu0
      %v344 = vadd.f32 %v288, %v343
      %345 = vdwg.mxu0
      %346 = vmatpush.msra.mxu0 0.0
      %347 = vmatpush.msra.mxu0 0.0
      %348 = vmatpush.msra.mxu0 0.0
      %349 = vmatpush.msra.mxu0 0.0
      %350 = vmatpush.msra.mxu0 0.0
      %351 = vmatpush.msra.mxu0 0.0
      %352 = vmatpush.msra.mxu0 0.0
      %353 = vmatpush.msra.mxu0 0.0
      %354 = vmatpush.msra.mxu0 0.0
      %355 = vmatpush.msra.mxu0 0.0
      %356 = vmatpush.msra.mxu0 0.0
      %357 = vmatpush.msra.mxu0 0.0
      %358 = vmatpush.msra.mxu0 0.0
      %359 = vmatpush.msra.mxu0 0.0
      %360 = vmatpush.msra.mxu0 0.0
      %v361 = vand.u32 %v302, 4294901760
      %v362 = vsub.f32 %v302, %v361
      %v363 = vand.u32 %v362, 4294901760
      %v364 = vsub.f32 %v362, %v363
      %v365 = vand.u32 %v364, 4294901760
      %366 = vmatpush.msra.mxu0 %v365
      %v367 = vand.u32 %v292, 4294901760
      %368 = vmatmul.f32.gmra.mxu0 %v367
      %v369 = vpop.f32.mrf.mxu0
      %v370 = vadd.f32 %v328, %v369
      %v371 = vand.u32 %v295, 4294901760
      %372 = vmatmul.f32.gmra.mxu0 %v371
      %v373 = vpop.f32.mrf.mxu0
      %v374 = vadd.f32 %v336, %v373
      %v375 = vand.u32 %v298, 4294901760
      %376 = vmatmul.f32.gmra.mxu0 %v375
      %v377 = vpop.f32.mrf.mxu0
      %v378 = vadd.f32 %v344, %v377
      %379 = vdwg.mxu0
      %380 = vmatpush.msra.mxu0 0.0
      %381 = vmatpush.msra.mxu0 0.0
      %382 = vmatpush.msra.mxu0 0.0
      %383 = vmatpush.msra.mxu0 0.0
      %384 = vmatpush.msra.mxu0 0.0
      %385 = vmatpush.msra.mxu0 0.0
      %386 = vmatpush.msra.mxu0 0.0
      %387 = vmatpush.msra.mxu0 0.0
      %388 = vmatpush.msra.mxu0 0.0
      %389 = vmatpush.msra.mxu0 0.0
      %390 = vmatpush.msra.mxu0 0.0
      %391 = vmatpush.msra.mxu0 0.0
      %392 = vmatpush.msra.mxu0 0.0
      %393 = vmatpush.msra.mxu0 0.0
      %394 = vmatpush.msra.mxu0 0.0
      %v395 = vand.u32 %v302, 4294901760
      %v396 = vsub.f32 %v302, %v395
      %397 = vmatpush.msra.mxu0 %v396
      %v398 = vand.u32 %v292, 4294901760
      %v399 = vsub.f32 %v292, %v398
      %400 = vmatmul.f32.gmra.mxu0 %v399
      %v401 = vpop.f32.mrf.mxu0
      %v402 = vadd.f32 %v370, %v401
      %v403 = vand.u32 %v295, 4294901760
      %v404 = vsub.f32 %v295, %v403
      %405 = vmatmul.f32.gmra.mxu0 %v404
      %v406 = vpop.f32.mrf.mxu0
      %v407 = vadd.f32 %v374, %v406
      %v408 = vand.u32 %v298, 4294901760
      %v409 = vsub.f32 %v298, %v408
      %410 = vmatmul.f32.gmra.mxu0 %v409
      %v411 = vpop.f32.mrf.mxu0
      %v412 = vadd.f32 %v378, %v411
      %413 = vdwg.mxu0
      %414 = vmatpush.msra.mxu0 0.0
      %415 = vmatpush.msra.mxu0 0.0
      %416 = vmatpush.msra.mxu0 0.0
      %417 = vmatpush.msra.mxu0 0.0
      %418 = vmatpush.msra.mxu0 0.0
      %419 = vmatpush.msra.mxu0 0.0
      %420 = vmatpush.msra.mxu0 0.0
      %421 = vmatpush.msra.mxu0 0.0
      %422 = vmatpush.msra.mxu0 0.0
      %423 = vmatpush.msra.mxu0 0.0
      %424 = vmatpush.msra.mxu0 0.0
      %425 = vmatpush.msra.mxu0 0.0
      %426 = vmatpush.msra.mxu0 0.0
      %427 = vmatpush.msra.mxu0 0.0
      %428 = vmatpush.msra.mxu0 0.0
      %v429 = vand.u32 %v302, 4294901760
      %430 = vmatpush.msra.mxu0 %v429
      %v431 = vand.u32 %v292, 4294901760
      %v432 = vsub.f32 %v292, %v431
      %v433 = vand.u32 %v432, 4294901760
      %434 = vmatmul.f32.gmra.mxu0 %v433
      %v435 = vpop.f32.mrf.mxu0
      %v436 = vadd.f32 %v402, %v435
      %v437 = vand.u32 %v295, 4294901760
      %v438 = vsub.f32 %v295, %v437
      %v439 = vand.u32 %v438, 4294901760
      %440 = vmatmul.f32.gmra.mxu0 %v439
      %v441 = vpop.f32.mrf.mxu0
      %v442 = vadd.f32 %v407, %v441
      %v443 = vand.u32 %v298, 4294901760
      %v444 = vsub.f32 %v298, %v443
      %v445 = vand.u32 %v444, 4294901760
      %446 = vmatmul.f32.gmra.mxu0 %v445
      %v447 = vpop.f32.mrf.mxu0
      %v448 = vadd.f32 %v412, %v447
      %449 = vdwg.mxu0
      %450 = vmatpush.msra.mxu0 0.0
      %451 = vmatpush.msra.mxu0 0.0
      %452 = vmatpush.msra.mxu0 0.0
      %453 = vmatpush.msra.mxu0 0.0
      %454 = vmatpush.msra.mxu0 0.0
      %455 = vmatpush.msra.mxu0 0.0
      %456 = vmatpush.msra.mxu0 0.0
      %457 = vmatpush.msra.mxu0 0.0
      %458 = vmatpush.msra.mxu0 0.0
      %459 = vmatpush.msra.mxu0 0.0
      %460 = vmatpush.msra.mxu0 0.0
      %461 = vmatpush.msra.mxu0 0.0
      %462 = vmatpush.msra.mxu0 0.0
      %463 = vmatpush.msra.mxu0 0.0
      %464 = vmatpush.msra.mxu0 0.0
      %v465 = vand.u32 %v302, 4294901760
      %v466 = vsub.f32 %v302, %v465
      %v467 = vand.u32 %v466, 4294901760
      %468 = vmatpush.msra.mxu0 %v467
      %v469 = vand.u32 %v292, 4294901760
      %470 = vmatmul.f32.gmra.mxu0 %v469
      %v471 = vpop.f32.mrf.mxu0
      %v472 = vadd.f32 %v436, %v471
      %v473 = vand.u32 %v295, 4294901760
      %474 = vmatmul.f32.gmra.mxu0 %v473
      %v475 = vpop.f32.mrf.mxu0
      %v476 = vadd.f32 %v442, %v475
      %v477 = vand.u32 %v298, 4294901760
      %478 = vmatmul.f32.gmra.mxu0 %v477
      %v479 = vpop.f32.mrf.mxu0
      %v480 = vadd.f32 %v448, %v479
      %481 = vdwg.mxu0
      %482 = vmatpush.msra.mxu0 0.0
      %483 = vmatpush.msra.mxu0 0.0
      %484 = vmatpush.msra.mxu0 0.0
      %485 = vmatpush.msra.mxu0 0.0
      %486 = vmatpush.msra.mxu0 0.0
      %487 = vmatpush.msra.mxu0 0.0
      %488 = vmatpush.msra.mxu0 0.0
      %489 = vmatpush.msra.mxu0 0.0
      %490 = vmatpush.msra.mxu0 0.0
      %491 = vmatpush.msra.mxu0 0.0
      %492 = vmatpush.msra.mxu0 0.0
      %493 = vmatpush.msra.mxu0 0.0
      %494 = vmatpush.msra.mxu0 0.0
      %495 = vmatpush.msra.mxu0 0.0
      %496 = vmatpush.msra.mxu0 0.0
      %v497 = vand.u32 %v302, 4294901760
      %498 = vmatpush.msra.mxu0 %v497
      %v499 = vand.u32 %v292, 4294901760
      %500 = vmatmul.f32.gmra.mxu0 %v499
      %v501 = vpop.f32.mrf.mxu0
      %v502 = vadd.f32 %v472, %v501
      %v503 = vand.u32 %v295, 4294901760
      %504 = vmatmul.f32.gmra.mxu0 %v503
      %v505 = vpop.f32.mrf.mxu0
      %v506 = vadd.f32 %v476, %v505
      %v507 = vand.u32 %v298, 4294901760
      %508 = vmatmul.f32.gmra.mxu0 %v507
      %v509 = vpop.f32.mrf.mxu0
      %v510 = vadd.f32 %v480, %v509
      %511 = vdwg.mxu0
      %v512 = vmax.f32 %v502, 0.0
      %v513 = vmax.f32 %v506, 0.0
      %v514 = vmax.f32 %v510, 0.0
      %v515 = vld [vmem:[%s3] sm:$0xff]
      %v516 = vld [vmem:[%s3 + $0x8] sm:$0xff]
      %v517 = vld [vmem:[%s3 + $0x10] sm:$0xff]
      %v518 = vld [vmem:[%s3 + $0x18] sm:$0x1]
      %v519 = vld [vmem:[%s4] sm:$0x1]
      %v521 = vperm.slane %v519, 0
      %vm523 = vcmask 203776
      %v525 = vsel %vm523, %v512, 0
      %v528 = vsel %vm523, %v513, 0
      %v531 = vsel %vm523, %v514, 0
      %vm533 = vcmask 1040384
      %v535 = vsel %vm533, %v518, 0
      %537 = vmatpush.msra.mxu0 0.0
      %538 = vmatpush.msra.mxu0 0.0
      %539 = vmatpush.msra.mxu0 0.0
      %540 = vmatpush.msra.mxu0 0.0
      %541 = vmatpush.msra.mxu0 0.0
      %542 = vmatpush.msra.mxu0 0.0
      %543 = vmatpush.msra.mxu0 0.0
      %544 = vmatpush.msra.mxu0 0.0
      %545 = vmatpush.msra.mxu0 0.0
      %546 = vmatpush.msra.mxu0 0.0
      %547 = vmatpush.msra.mxu0 0.0
      %548 = vmatpush.msra.mxu0 0.0
      %v549 = vand.u32 %v535, 4294901760
      %550 = vmatpush.msra.mxu0 %v549
      %v551 = vand.u32 %v517, 4294901760
      %552 = vmatpush.msra.mxu0 %v551
      %v553 = vand.u32 %v516, 4294901760
      %554 = vmatpush.msra.mxu0 %v553
      %v555 = vand.u32 %v515, 4294901760
      %556 = vmatpush.msra.mxu0 %v555
      %v557 = vand.u32 %v525, 4294901760
      %v558 = vsub.f32 %v525, %v557
      %v559 = vand.u32 %v558, 4294901760
      %v560 = vsub.f32 %v558, %v559
      %v561 = vand.u32 %v560, 4294901760
      %562 = vmatmul.f32.gmra.mxu0 %v561
      %v563 = vpop.f32.mrf.mxu0
      %v564 = vadd.f32 %v521, %v563
      %v565 = vand.u32 %v528, 4294901760
      %v566 = vsub.f32 %v528, %v565
      %v567 = vand.u32 %v566, 4294901760
      %v568 = vsub.f32 %v566, %v567
      %v569 = vand.u32 %v568, 4294901760
      %570 = vmatmul.f32.gmra.mxu0 %v569
      %v571 = vpop.f32.mrf.mxu0
      %v572 = vadd.f32 %v521, %v571
      %v573 = vand.u32 %v531, 4294901760
      %v574 = vsub.f32 %v531, %v573
      %v575 = vand.u32 %v574, 4294901760
      %v576 = vsub.f32 %v574, %v575
      %v577 = vand.u32 %v576, 4294901760
      %578 = vmatmul.f32.gmra.mxu0 %v577
      %v579 = vpop.f32.mrf.mxu0
      %v580 = vadd.f32 %v521, %v579
      %581 = vdwg.mxu0
      %582 = vmatpush.msra.mxu0 0.0
      %583 = vmatpush.msra.mxu0 0.0
      %584 = vmatpush.msra.mxu0 0.0
      %585 = vmatpush.msra.mxu0 0.0
      %586 = vmatpush.msra.mxu0 0.0
      %587 = vmatpush.msra.mxu0 0.0
      %588 = vmatpush.msra.mxu0 0.0
      %589 = vmatpush.msra.mxu0 0.0
      %590 = vmatpush.msra.mxu0 0.0
      %591 = vmatpush.msra.mxu0 0.0
      %592 = vmatpush.msra.mxu0 0.0
      %593 = vmatpush.msra.mxu0 0.0
      %v594 = vand.u32 %v535, 4294901760
      %v595 = vsub.f32 %v535, %v594
      %v596 = vand.u32 %v595, 4294901760
      %v597 = vsub.f32 %v595, %v596
      %v598 = vand.u32 %v597, 4294901760
      %599 = vmatpush.msra.mxu0 %v598
      %v600 = vand.u32 %v517, 4294901760
      %v601 = vsub.f32 %v517, %v600
      %v602 = vand.u32 %v601, 4294901760
      %v603 = vsub.f32 %v601, %v602
      %v604 = vand.u32 %v603, 4294901760
      %605 = vmatpush.msra.mxu0 %v604
      %v606 = vand.u32 %v516, 4294901760
      %v607 = vsub.f32 %v516, %v606
      %v608 = vand.u32 %v607, 4294901760
      %v609 = vsub.f32 %v607, %v608
      %v610 = vand.u32 %v609, 4294901760
      %611 = vmatpush.msra.mxu0 %v610
      %v612 = vand.u32 %v515, 4294901760
      %v613 = vsub.f32 %v515, %v612
      %v614 = vand.u32 %v613, 4294901760
      %v615 = vsub.f32 %v613, %v614
      %v616 = vand.u32 %v615, 4294901760
      %617 = vmatpush.msra.mxu0 %v616
      %v618 = vand.u32 %v525, 4294901760
      %619 = vmatmul.f32.gmra.mxu0 %v618
      %v620 = vpop.f32.mrf.mxu0
      %v621 = vadd.f32 %v564, %v620
      %v622 = vand.u32 %v528, 4294901760
      %623 = vmatmul.f32.gmra.mxu0 %v622
      %v624 = vpop.f32.mrf.mxu0
      %v625 = vadd.f32 %v572, %v624
      %v626 = vand.u32 %v531, 4294901760
      %627 = vmatmul.f32.gmra.mxu0 %v626
      %v628 = vpop.f32.mrf.mxu0
      %v629 = vadd.f32 %v580, %v628
      %630 = vdwg.mxu0
      %631 = vmatpush.msra.mxu0 0.0
      %632 = vmatpush.msra.mxu0 0.0
      %633 = vmatpush.msra.mxu0 0.0
      %634 = vmatpush.msra.mxu0 0.0
      %635 = vmatpush.msra.mxu0 0.0
      %636 = vmatpush.msra.mxu0 0.0
      %637 = vmatpush.msra.mxu0 0.0
      %638 = vmatpush.msra.mxu0 0.0
      %639 = vmatpush.msra.mxu0 0.0
      %640 = vmatpush.msra.mxu0 0.0
      %641 = vmatpush.msra.mxu0 0.0
      %642 = vmatpush.msra.mxu0 0.0
      %v643 = vand.u32 %v535, 4294901760
      %v644 = vsub.f32 %v535, %v643
      %645 = vmatpush.msra.mxu0 %v644
      %v646 = vand.u32 %v517, 4294901760
      %v647 = vsub.f32 %v517, %v646
      %648 = vmatpush.msra.mxu0 %v647
      %v649 = vand.u32 %v516, 4294901760
      %v650 = vsub.f32 %v516, %v649
      %651 = vmatpush.msra.mxu0 %v650
      %v652 = vand.u32 %v515, 4294901760
      %v653 = vsub.f32 %v515, %v652
      %654 = vmatpush.msra.mxu0 %v653
      %v655 = vand.u32 %v525, 4294901760
      %v656 = vsub.f32 %v525, %v655
      %657 = vmatmul.f32.gmra.mxu0 %v656
      %v658 = vpop.f32.mrf.mxu0
      %v659 = vadd.f32 %v621, %v658
      %v660 = vand.u32 %v528, 4294901760
      %v661 = vsub.f32 %v528, %v660
      %662 = vmatmul.f32.gmra.mxu0 %v661
      %v663 = vpop.f32.mrf.mxu0
      %v664 = vadd.f32 %v625, %v663
      %v665 = vand.u32 %v531, 4294901760
      %v666 = vsub.f32 %v531, %v665
      %667 = vmatmul.f32.gmra.mxu0 %v666
      %v668 = vpop.f32.mrf.mxu0
      %v669 = vadd.f32 %v629, %v668
      %670 = vdwg.mxu0
      %671 = vmatpush.msra.mxu0 0.0
      %672 = vmatpush.msra.mxu0 0.0
      %673 = vmatpush.msra.mxu0 0.0
      %674 = vmatpush.msra.mxu0 0.0
      %675 = vmatpush.msra.mxu0 0.0
      %676 = vmatpush.msra.mxu0 0.0
      %677 = vmatpush.msra.mxu0 0.0
      %678 = vmatpush.msra.mxu0 0.0
      %679 = vmatpush.msra.mxu0 0.0
      %680 = vmatpush.msra.mxu0 0.0
      %681 = vmatpush.msra.mxu0 0.0
      %682 = vmatpush.msra.mxu0 0.0
      %v683 = vand.u32 %v535, 4294901760
      %684 = vmatpush.msra.mxu0 %v683
      %v685 = vand.u32 %v517, 4294901760
      %686 = vmatpush.msra.mxu0 %v685
      %v687 = vand.u32 %v516, 4294901760
      %688 = vmatpush.msra.mxu0 %v687
      %v689 = vand.u32 %v515, 4294901760
      %690 = vmatpush.msra.mxu0 %v689
      %v691 = vand.u32 %v525, 4294901760
      %v692 = vsub.f32 %v525, %v691
      %v693 = vand.u32 %v692, 4294901760
      %694 = vmatmul.f32.gmra.mxu0 %v693
      %v695 = vpop.f32.mrf.mxu0
      %v696 = vadd.f32 %v659, %v695
      %v697 = vand.u32 %v528, 4294901760
      %v698 = vsub.f32 %v528, %v697
      %v699 = vand.u32 %v698, 4294901760
      %700 = vmatmul.f32.gmra.mxu0 %v699
      %v701 = vpop.f32.mrf.mxu0
      %v702 = vadd.f32 %v664, %v701
      %v703 = vand.u32 %v531, 4294901760
      %v704 = vsub.f32 %v531, %v703
      %v705 = vand.u32 %v704, 4294901760
      %706 = vmatmul.f32.gmra.mxu0 %v705
      %v707 = vpop.f32.mrf.mxu0
      %v708 = vadd.f32 %v669, %v707
      %709 = vdwg.mxu0
      %710 = vmatpush.msra.mxu0 0.0
      %711 = vmatpush.msra.mxu0 0.0
      %712 = vmatpush.msra.mxu0 0.0
      %713 = vmatpush.msra.mxu0 0.0
      %714 = vmatpush.msra.mxu0 0.0
      %715 = vmatpush.msra.mxu0 0.0
      %716 = vmatpush.msra.mxu0 0.0
      %717 = vmatpush.msra.mxu0 0.0
      %718 = vmatpush.msra.mxu0 0.0
      %719 = vmatpush.msra.mxu0 0.0
      %720 = vmatpush.msra.mxu0 0.0
      %721 = vmatpush.msra.mxu0 0.0
      %v722 = vand.u32 %v535, 4294901760
      %v723 = vsub.f32 %v535, %v722
      %v724 = vand.u32 %v723, 4294901760
      %725 = vmatpush.msra.mxu0 %v724
      %v726 = vand.u32 %v517, 4294901760
      %v727 = vsub.f32 %v517, %v726
      %v728 = vand.u32 %v727, 4294901760
      %729 = vmatpush.msra.mxu0 %v728
      %v730 = vand.u32 %v516, 4294901760
      %v731 = vsub.f32 %v516, %v730
      %v732 = vand.u32 %v731, 4294901760
      %733 = vmatpush.msra.mxu0 %v732
      %v734 = vand.u32 %v515, 4294901760
      %v735 = vsub.f32 %v515, %v734
      %v736 = vand.u32 %v735, 4294901760
      %737 = vmatpush.msra.mxu0 %v736
      %v738 = vand.u32 %v525, 4294901760
      %739 = vmatmul.f32.gmra.mxu0 %v738
      %v740 = vpop.f32.mrf.mxu0
      %v741 = vadd.f32 %v696, %v740
      %v742 = vand.u32 %v528, 4294901760
      %743 = vmatmul.f32.gmra.mxu0 %v742
      %v744 = vpop.f32.mrf.mxu0
      %v745 = vadd.f32 %v702, %v744
      %v746 = vand.u32 %v531, 4294901760
      %747 = vmatmul.f32.gmra.mxu0 %v746
      %v748 = vpop.f32.mrf.mxu0
      %v749 = vadd.f32 %v708, %v748
      %750 = vdwg.mxu0
      %751 = vmatpush.msra.mxu0 0.0
      %752 = vmatpush.msra.mxu0 0.0
      %753 = vmatpush.msra.mxu0 0.0
      %754 = vmatpush.msra.mxu0 0.0
      %755 = vmatpush.msra.mxu0 0.0
      %756 = vmatpush.msra.mxu0 0.0
      %757 = vmatpush.msra.mxu0 0.0
      %758 = vmatpush.msra.mxu0 0.0
      %759 = vmatpush.msra.mxu0 0.0
      %760 = vmatpush.msra.mxu0 0.0
      %761 = vmatpush.msra.mxu0 0.0
      %762 = vmatpush.msra.mxu0 0.0
      %v763 = vand.u32 %v535, 4294901760
      %764 = vmatpush.msra.mxu0 %v763
      %v765 = vand.u32 %v517, 4294901760
      %766 = vmatpush.msra.mxu0 %v765
      %v767 = vand.u32 %v516, 4294901760
      %768 = vmatpush.msra.mxu0 %v767
      %v769 = vand.u32 %v515, 4294901760
      %770 = vmatpush.msra.mxu0 %v769
      %v771 = vand.u32 %v525, 4294901760
      %772 = vmatmul.f32.gmra.mxu0 %v771
      %v773 = vpop.f32.mrf.mxu0
      %v774 = vadd.f32 %v741, %v773
      %v775 = vand.u32 %v528, 4294901760
      %776 = vmatmul.f32.gmra.mxu0 %v775
      %v777 = vpop.f32.mrf.mxu0
      %v778 = vadd.f32 %v745, %v777
      %v779 = vand.u32 %v531, 4294901760
      %780 = vmatmul.f32.gmra.mxu0 %v779
      %v781 = vpop.f32.mrf.mxu0
      %v782 = vadd.f32 %v749, %v781
      %783 = vdwg.mxu0
      %v784 = vmax.f32 %v774, 0.0
      %v785 = vmax.f32 %v778, 0.0
      %v786 = vmax.f32 %v782, 0.0
      %v787 = vld [vmem:[%s5] sm:$0xff]
      %v788 = vld [vmem:[%s5 + $0x8] sm:$0xff]
      %v789 = vld [vmem:[%s5 + $0x10] sm:$0xff]
      %v790 = vld [vmem:[%s5 + $0x18] sm:$0x3f]
      %v791 = vld [vmem:[%s6] sm:$0x1]
      %v793 = vperm.slane %v791, 0
      %vm795 = vcmask 244736
      %v797 = vsel %vm795, %v784, 0
      %v800 = vsel %vm795, %v785, 0
      %v803 = vsel %vm795, %v786, 0
      %vm805 = vcmask 1045504
      %v807 = vsel %vm805, %v790, 0
      %809 = vmatpush.msra.mxu0 0.0
      %810 = vmatpush.msra.mxu0 0.0
      %811 = vmatpush.msra.mxu0 0.0
      %812 = vmatpush.msra.mxu0 0.0
      %813 = vmatpush.msra.mxu0 0.0
      %814 = vmatpush.msra.mxu0 0.0
      %815 = vmatpush.msra.mxu0 0.0
      %816 = vmatpush.msra.mxu0 0.0
      %817 = vmatpush.msra.mxu0 0.0
      %818 = vmatpush.msra.mxu0 0.0
      %819 = vmatpush.msra.mxu0 0.0
      %820 = vmatpush.msra.mxu0 0.0
      %v821 = vand.u32 %v807, 4294901760
      %822 = vmatpush.msra.mxu0 %v821
      %v823 = vand.u32 %v789, 4294901760
      %824 = vmatpush.msra.mxu0 %v823
      %v825 = vand.u32 %v788, 4294901760
      %826 = vmatpush.msra.mxu0 %v825
      %v827 = vand.u32 %v787, 4294901760
      %828 = vmatpush.msra.mxu0 %v827
      %v829 = vand.u32 %v797, 4294901760
      %v830 = vsub.f32 %v797, %v829
      %v831 = vand.u32 %v830, 4294901760
      %v832 = vsub.f32 %v830, %v831
      %v833 = vand.u32 %v832, 4294901760
      %834 = vmatmul.f32.gmra.mxu0 %v833
      %v835 = vpop.f32.mrf.mxu0
      %v836 = vadd.f32 %v793, %v835
      %v837 = vand.u32 %v800, 4294901760
      %v838 = vsub.f32 %v800, %v837
      %v839 = vand.u32 %v838, 4294901760
      %v840 = vsub.f32 %v838, %v839
      %v841 = vand.u32 %v840, 4294901760
      %842 = vmatmul.f32.gmra.mxu0 %v841
      %v843 = vpop.f32.mrf.mxu0
      %v844 = vadd.f32 %v793, %v843
      %v845 = vand.u32 %v803, 4294901760
      %v846 = vsub.f32 %v803, %v845
      %v847 = vand.u32 %v846, 4294901760
      %v848 = vsub.f32 %v846, %v847
      %v849 = vand.u32 %v848, 4294901760
      %850 = vmatmul.f32.gmra.mxu0 %v849
      %v851 = vpop.f32.mrf.mxu0
      %v852 = vadd.f32 %v793, %v851
      %853 = vdwg.mxu0
      %854 = vmatpush.msra.mxu0 0.0
      %855 = vmatpush.msra.mxu0 0.0
      %856 = vmatpush.msra.mxu0 0.0
      %857 = vmatpush.msra.mxu0 0.0
      %858 = vmatpush.msra.mxu0 0.0
      %859 = vmatpush.msra.mxu0 0.0
      %860 = vmatpush.msra.mxu0 0.0
      %861 = vmatpush.msra.mxu0 0.0
      %862 = vmatpush.msra.mxu0 0.0
      %863 = vmatpush.msra.mxu0 0.0
      %864 = vmatpush.msra.mxu0 0.0
      %865 = vmatpush.msra.mxu0 0.0
      %v866 = vand.u32 %v807, 4294901760
      %v867 = vsub.f32 %v807, %v866
      %v868 = vand.u32 %v867, 4294901760
      %v869 = vsub.f32 %v867, %v868
      %v870 = vand.u32 %v869, 4294901760
      %871 = vmatpush.msra.mxu0 %v870
      %v872 = vand.u32 %v789, 4294901760
      %v873 = vsub.f32 %v789, %v872
      %v874 = vand.u32 %v873, 4294901760
      %v875 = vsub.f32 %v873, %v874
      %v876 = vand.u32 %v875, 4294901760
      %877 = vmatpush.msra.mxu0 %v876
      %v878 = vand.u32 %v788, 4294901760
      %v879 = vsub.f32 %v788, %v878
      %v880 = vand.u32 %v879, 4294901760
      %v881 = vsub.f32 %v879, %v880
      %v882 = vand.u32 %v881, 4294901760
      %883 = vmatpush.msra.mxu0 %v882
      %v884 = vand.u32 %v787, 4294901760
      %v885 = vsub.f32 %v787, %v884
      %v886 = vand.u32 %v885, 4294901760
      %v887 = vsub.f32 %v885, %v886
      %v888 = vand.u32 %v887, 4294901760
      %889 = vmatpush.msra.mxu0 %v888
      %v890 = vand.u32 %v797, 4294901760
      %891 = vmatmul.f32.gmra.mxu0 %v890
      %v892 = vpop.f32.mrf.mxu0
      %v893 = vadd.f32 %v836, %v892
      %v894 = vand.u32 %v800, 4294901760
      %895 = vmatmul.f32.gmra.mxu0 %v894
      %v896 = vpop.f32.mrf.mxu0
      %v897 = vadd.f32 %v844, %v896
      %v898 = vand.u32 %v803, 4294901760
      %899 = vmatmul.f32.gmra.mxu0 %v898
      %v900 = vpop.f32.mrf.mxu0
      %v901 = vadd.f32 %v852, %v900
      %902 = vdwg.mxu0
      %903 = vmatpush.msra.mxu0 0.0
      %904 = vmatpush.msra.mxu0 0.0
      %905 = vmatpush.msra.mxu0 0.0
      %906 = vmatpush.msra.mxu0 0.0
      %907 = vmatpush.msra.mxu0 0.0
      %908 = vmatpush.msra.mxu0 0.0
      %909 = vmatpush.msra.mxu0 0.0
      %910 = vmatpush.msra.mxu0 0.0
      %911 = vmatpush.msra.mxu0 0.0
      %912 = vmatpush.msra.mxu0 0.0
      %913 = vmatpush.msra.mxu0 0.0
      %914 = vmatpush.msra.mxu0 0.0
      %v915 = vand.u32 %v807, 4294901760
      %v916 = vsub.f32 %v807, %v915
      %917 = vmatpush.msra.mxu0 %v916
      %v918 = vand.u32 %v789, 4294901760
      %v919 = vsub.f32 %v789, %v918
      %920 = vmatpush.msra.mxu0 %v919
      %v921 = vand.u32 %v788, 4294901760
      %v922 = vsub.f32 %v788, %v921
      %923 = vmatpush.msra.mxu0 %v922
      %v924 = vand.u32 %v787, 4294901760
      %v925 = vsub.f32 %v787, %v924
      %926 = vmatpush.msra.mxu0 %v925
      %v927 = vand.u32 %v797, 4294901760
      %v928 = vsub.f32 %v797, %v927
      %929 = vmatmul.f32.gmra.mxu0 %v928
      %v930 = vpop.f32.mrf.mxu0
      %v931 = vadd.f32 %v893, %v930
      %v932 = vand.u32 %v800, 4294901760
      %v933 = vsub.f32 %v800, %v932
      %934 = vmatmul.f32.gmra.mxu0 %v933
      %v935 = vpop.f32.mrf.mxu0
      %v936 = vadd.f32 %v897, %v935
      %v937 = vand.u32 %v803, 4294901760
      %v938 = vsub.f32 %v803, %v937
      %939 = vmatmul.f32.gmra.mxu0 %v938
      %v940 = vpop.f32.mrf.mxu0
      %v941 = vadd.f32 %v901, %v940
      %942 = vdwg.mxu0
      %943 = vmatpush.msra.mxu0 0.0
      %944 = vmatpush.msra.mxu0 0.0
      %945 = vmatpush.msra.mxu0 0.0
      %946 = vmatpush.msra.mxu0 0.0
      %947 = vmatpush.msra.mxu0 0.0
      %948 = vmatpush.msra.mxu0 0.0
      %949 = vmatpush.msra.mxu0 0.0
      %950 = vmatpush.msra.mxu0 0.0
      %951 = vmatpush.msra.mxu0 0.0
      %952 = vmatpush.msra.mxu0 0.0
      %953 = vmatpush.msra.mxu0 0.0
      %954 = vmatpush.msra.mxu0 0.0
      %v955 = vand.u32 %v807, 4294901760
      %956 = vmatpush.msra.mxu0 %v955
      %v957 = vand.u32 %v789, 4294901760
      %958 = vmatpush.msra.mxu0 %v957
      %v959 = vand.u32 %v788, 4294901760
      %960 = vmatpush.msra.mxu0 %v959
      %v961 = vand.u32 %v787, 4294901760
      %962 = vmatpush.msra.mxu0 %v961
      %v963 = vand.u32 %v797, 4294901760
      %v964 = vsub.f32 %v797, %v963
      %v965 = vand.u32 %v964, 4294901760
      %966 = vmatmul.f32.gmra.mxu0 %v965
      %v967 = vpop.f32.mrf.mxu0
      %v968 = vadd.f32 %v931, %v967
      %v969 = vand.u32 %v800, 4294901760
      %v970 = vsub.f32 %v800, %v969
      %v971 = vand.u32 %v970, 4294901760
      %972 = vmatmul.f32.gmra.mxu0 %v971
      %v973 = vpop.f32.mrf.mxu0
      %v974 = vadd.f32 %v936, %v973
      %v975 = vand.u32 %v803, 4294901760
      %v976 = vsub.f32 %v803, %v975
      %v977 = vand.u32 %v976, 4294901760
      %978 = vmatmul.f32.gmra.mxu0 %v977
      %v979 = vpop.f32.mrf.mxu0
      %v980 = vadd.f32 %v941, %v979
      %981 = vdwg.mxu0
      %982 = vmatpush.msra.mxu0 0.0
      %983 = vmatpush.msra.mxu0 0.0
      %984 = vmatpush.msra.mxu0 0.0
      %985 = vmatpush.msra.mxu0 0.0
      %986 = vmatpush.msra.mxu0 0.0
      %987 = vmatpush.msra.mxu0 0.0
      %988 = vmatpush.msra.mxu0 0.0
      %989 = vmatpush.msra.mxu0 0.0
      %990 = vmatpush.msra.mxu0 0.0
      %991 = vmatpush.msra.mxu0 0.0
      %992 = vmatpush.msra.mxu0 0.0
      %993 = vmatpush.msra.mxu0 0.0
      %v994 = vand.u32 %v807, 4294901760
      %v995 = vsub.f32 %v807, %v994
      %v996 = vand.u32 %v995, 4294901760
      %997 = vmatpush.msra.mxu0 %v996
      %v998 = vand.u32 %v789, 4294901760
      %v999 = vsub.f32 %v789, %v998
      %v1000 = vand.u32 %v999, 4294901760
      %1001 = vmatpush.msra.mxu0 %v1000
      %v1002 = vand.u32 %v788, 4294901760
      %v1003 = vsub.f32 %v788, %v1002
      %v1004 = vand.u32 %v1003, 4294901760
      %1005 = vmatpush.msra.mxu0 %v1004
      %v1006 = vand.u32 %v787, 4294901760
      %v1007 = vsub.f32 %v787, %v1006
      %v1008 = vand.u32 %v1007, 4294901760
      %1009 = vmatpush.msra.mxu0 %v1008
      %v1010 = vand.u32 %v797, 4294901760
      %1011 = vmatmul.f32.gmra.mxu0 %v1010
      %v1012 = vpop.f32.mrf.mxu0
      %v1013 = vadd.f32 %v968, %v1012
      %v1014 = vand.u32 %v800, 4294901760
      %1015 = vmatmul.f32.gmra.mxu0 %v1014
      %v1016 = vpop.f32.mrf.mxu0
      %v1017 = vadd.f32 %v974, %v1016
      %v1018 = vand.u32 %v803, 4294901760
      %1019 = vmatmul.f32.gmra.mxu0 %v1018
      %v1020 = vpop.f32.mrf.mxu0
      %v1021 = vadd.f32 %v980, %v1020
      %1022 = vdwg.mxu0
      %1023 = vmatpush.msra.mxu0 0.0
      %1024 = vmatpush.msra.mxu0 0.0
      %1025 = vmatpush.msra.mxu0 0.0
      %1026 = vmatpush.msra.mxu0 0.0
      %1027 = vmatpush.msra.mxu0 0.0
      %1028 = vmatpush.msra.mxu0 0.0
      %1029 = vmatpush.msra.mxu0 0.0
      %1030 = vmatpush.msra.mxu0 0.0
      %1031 = vmatpush.msra.mxu0 0.0
      %1032 = vmatpush.msra.mxu0 0.0
      %1033 = vmatpush.msra.mxu0 0.0
      %1034 = vmatpush.msra.mxu0 0.0
      %v1035 = vand.u32 %v807, 4294901760
      %1036 = vmatpush.msra.mxu0 %v1035
      %v1037 = vand.u32 %v789, 4294901760
      %1038 = vmatpush.msra.mxu0 %v1037
      %v1039 = vand.u32 %v788, 4294901760
      %1040 = vmatpush.msra.mxu0 %v1039
      %v1041 = vand.u32 %v787, 4294901760
      %1042 = vmatpush.msra.mxu0 %v1041
      %v1043 = vand.u32 %v797, 4294901760
      %1044 = vmatmul.f32.gmra.mxu0 %v1043
      %v1045 = vpop.f32.mrf.mxu0
      %v1046 = vadd.f32 %v1013, %v1045
      %v1047 = vand.u32 %v800, 4294901760
      %1048 = vmatmul.f32.gmra.mxu0 %v1047
      %v1049 = vpop.f32.mrf.mxu0
      %v1050 = vadd.f32 %v1017, %v1049
      %v1051 = vand.u32 %v803, 4294901760
      %1052 = vmatmul.f32.gmra.mxu0 %v1051
      %v1053 = vpop.f32.mrf.mxu0
      %v1054 = vadd.f32 %v1021, %v1053
      %1055 = vdwg.mxu0
      %vm1056 = vcmask 23552
      %1057 = vst.msk [vmem:[%s280] sm:$0xff] %vm1056, %v1046
      %1058 = vst.msk [vmem:[%s280 + $0x8] sm:$0xff] %vm1056, %v1050
      %1059 = vst.msk [vmem:[%s280 + $0x10] sm:$0xff] %vm1056, %v1054
      %s1060 = smul.u32 3, %s18
      %p1061 = scmp.lt.s32.totalorder %s1060, 5
      %s1062 = scalar_select %p1061, %s1060, 5
      %s1063 = smul.addr %s1062, 8
      %s1064 = scalar_lea.vmem %s7, %s1063
      // Predicated region
      $region49: #{tpu_custom_call.1} parent=47 // pred_check
        %p1065 = pneg %p188
      $region50: #{tpu_custom_call.1} parent=47 // pred_check_branch
        %1067 = sbr.rel (%p1065) target = $region52
      $region51: #{tpu_custom_call.1} parent=47 // pred_region
        %s1068 = smul.u32 3, %s18
      $region52: #{tpu_custom_call.1} parent=47 // pred_fallthru
        _
    $region48: #{tpu_custom_call.1} parent=5 // pred_fallthru
      _
    %p1069 = scmp.le.s32.totalorder 2, %s13
    // Predicated region
    $region53: #{tpu_custom_call.1} parent=5 // pred_check
      %p1070 = pneg %p1069
    $region54: #{tpu_custom_call.1} parent=5 // pred_check_branch
      %1072 = sbr.rel (%p1070) target = $region56
    $region55: #{tpu_custom_call.1} parent=5 // pred_region
      %s1073 = ssub.s32 %s13, 2
      // Predicated region
      $region57: #{tpu_custom_call.1} parent=55 // pred_check
        %p1074 = pneg %p194
      $region58: #{tpu_custom_call.1} parent=55 // pred_check_branch
        %1076 = sbr.rel (%p1074) target = $region60
      $region59: #{tpu_custom_call.1} parent=55 // pred_region
        %s1077 = smul.u32 3, %s19
        %p1078 = scmp.lt.s32.totalorder %s1077, 5
        %s1079 = scalar_select %p1078, %s1077, 5
        %s1080 = smul.addr %s1079, 8
        %s1081 = scalar_lea.vmem %s7, %s1080
      $region60: #{tpu_custom_call.1} parent=55 // pred_fallthru
        _
    $region56: #{tpu_custom_call.1} parent=5 // pred_fallthru
      _
  $region6: #{tpu_custom_call.1} parent=0 // loop_footer
    %s17 = sadd.s32 1, %s13
  $region7: #{tpu_custom_call.1} parent=0 // loop_footer_branch
    %12 = sbr.rel target = $region3
  $region8: #{tpu_custom_call.1} parent=0 // loop_exit
    _

</llo_original>
